<compile_context>
chip_gen: v7x
topology: tpu7x:2x2x1
jax: 0.10.0
libtpu: 0.0.40
codegen_flags: <defaults>
</compile_context>

<pallas_src>
import jax
import jax.numpy as jnp
import numpy as np
from jax.experimental import pallas as pl
from jax.experimental.pallas import tpu as pltpu


OUT_LANES = 128               # lane-dense output slab width (column 0 is the result)
_VMEM_RESIDENT_LIMIT = 24 << 20   # conservative: fits default scoped VMEM on v5e/v6e/v7x


def _cycle_decoder_kernel(x_ref, h0_ref, c0_ref, wih_ref, whh_ref, b_ref,
                          wfc_ref, bfc_ref, hn_ref, cn_ref, out_ref):
    """Whole CycleDecoder forward in a single invocation (no grid).

    x_ref  : (B, H)        f32   decoder input (seq_len == 1)
    h0_ref : (L, B, H)     f32   encoder hidden state
    c0_ref : (L, B, H)     f32   encoder cell state
    wih_ref: (L, H, 4H)    bf16  W_ih^T per layer
    whh_ref: (L, H, 4H)    bf16  W_hh^T per layer
    b_ref  : (L, 1, 4H)    f32   b_ih + b_hh
    wfc_ref: (1, H)        f32   FC weight row
    bfc_ref: (1,)          f32   FC bias (SMEM scalar)
    hn/cn  : (L, B, H)     f32   new LSTM state
    out_ref: (B, 128)      f32   lane-dense FC-output slab (column 0 is the result)
    """
    L, B, H = h0_ref.shape

    # ---- Hoisted h-path: all L encoder-state gate matmuls up front (bias folded in).
    # These depend only on kernel inputs, so they are off the layer-serial chain and
    # the compiler can overlap them with layer 0's gate math.
    h_gates = [
        jnp.dot(h0_ref[l].astype(jnp.bfloat16), whh_ref[l],
                preferred_element_type=jnp.float32) + b_ref[l]          # (B, 4H) f32
        for l in range(L)
    ]

    # ---- Serial layer loop: only the x-path matmul (K = H) remains on the chain.
    cur = x_ref[...]                                    # (B, H) f32, layer input
    for layer in range(L):                              # L is small & static -> unrolled
        gates = jnp.dot(cur.astype(jnp.bfloat16), wih_ref[layer],
                        preferred_element_type=jnp.float32) + h_gates[layer]

        i_g = jax.nn.sigmoid(gates[:, 0 * H:1 * H])
        f_g = jax.nn.sigmoid(gates[:, 1 * H:2 * H])
        g_g = jnp.tanh(gates[:, 2 * H:3 * H])
        o_g = jax.nn.sigmoid(gates[:, 3 * H:4 * H])

        c_new = f_g * c0_ref[layer] + i_g * g_g         # f32 state math (v5e-safe)
        h_new = o_g * jnp.tanh(c_new)

        hn_ref[layer] = h_new
        cn_ref[layer] = c_new
        cur = h_new                                     # feed next layer

    # dec_output_FC (hidden -> 1): VPU multiply + lane reduce (no N=1 MXU matmul).
    y = jnp.sum(cur * wfc_ref[...], axis=-1, keepdims=True) + bfc_ref[0]   # (B, 1)
    out_ref[...] = jnp.broadcast_to(y, out_ref.shape)   # lane-dense store


def prepare_cycle_decoder_params(w_ih, w_hh, b_ih, b_hh, w_fc, b_fc):
    """Pack / transpose parameters ONCE at load time (hoisted off the hot path).

    w_ih, w_hh : (L, 4H, H)   PyTorch LSTM layout (input size == hidden size here)
    b_ih, b_hh : (L, 4H)
    w_fc       : (1, H)
    b_fc       : (1,)
    """
    L, four_h, H = w_ih.shape
    w_ih_t = jnp.transpose(w_ih, (0, 2, 1)).astype(jnp.bfloat16)       # (L, H, 4H)
    w_hh_t = jnp.transpose(w_hh, (0, 2, 1)).astype(jnp.bfloat16)       # (L, H, 4H)
    b_sum = (b_ih + b_hh).astype(jnp.float32).reshape(L, 1, four_h)    # (L, 1, 4H)
    w_fc_row = w_fc.astype(jnp.float32).reshape(1, H)                  # (1, H)
    b_fc_s = b_fc.astype(jnp.float32).reshape(1)                       # (1,)
    return w_ih_t, w_hh_t, b_sum, w_fc_row, b_fc_s


def _vmem_resident_bytes(L, B, H):
    """Approximate VMEM footprint of the gridless, fully-resident kernel."""
    weights = 2 * L * H * 4 * H * 2          # two bf16 (L, H, 4H) slabs
    biases = L * 4 * H * 4
    states = (1 + 4 * L) * B * H * 4          # x + h0/c0 + hn/cn (f32)
    out = B * OUT_LANES * 4 + H * 4 + 4
    return weights + biases + states + out


@jax.jit
def cycle_decoder_forward(x, h0, c0, params):
    """
    x      : (B, H)      decoder input
    h0, c0 : (L, B, H)   encoder hidden / cell state
    params : output of prepare_cycle_decoder_params
    returns (output (B, 1), (h_n (L, B, H), c_n (L, B, H)))
    """
    w_ih_t, w_hh_t, b_sum, w_fc_row, b_fc_s = params
    L, B, H = h0.shape

    if _vmem_resident_bytes(L, B, H) > _VMEM_RESIDENT_LIMIT:
        # TODO(synk): switch to a per-layer streamed grid (layer axis "arbitrary",
        # per-layer BlockSpecs on the weights, double-buffered) when H/L scale;
        # threshold is ~half as large on v7x (64 MiB VMEM) as on v5e/v6e (128 MiB).
        raise NotImplementedError(
            "CycleDecoder weights exceed the VMEM-resident budget; use a per-layer "
            "streamed grid variant.")

    h_n, c_n, out_slab = pl.pallas_call(
        _cycle_decoder_kernel,
        out_shape=(
            jax.ShapeDtypeStruct((L, B, H), jnp.float32),
            jax.ShapeDtypeStruct((L, B, H), jnp.float32),
            jax.ShapeDtypeStruct((B, OUT_LANES), jnp.float32),
        ),
        in_specs=[
            pl.BlockSpec(memory_space=pltpu.MemorySpace.VMEM),   # x
            pl.BlockSpec(memory_space=pltpu.MemorySpace.VMEM),   # h0
            pl.BlockSpec(memory_space=pltpu.MemorySpace.VMEM),   # c0
            pl.BlockSpec(memory_space=pltpu.MemorySpace.VMEM),   # W_ih^T (bf16)
            pl.BlockSpec(memory_space=pltpu.MemorySpace.VMEM),   # W_hh^T (bf16)
            pl.BlockSpec(memory_space=pltpu.MemorySpace.VMEM),   # b_ih + b_hh
            pl.BlockSpec(memory_space=pltpu.MemorySpace.VMEM),   # FC weight row
            pl.BlockSpec(memory_space=pltpu.MemorySpace.SMEM),   # FC bias scalar
        ],
        out_specs=(
            pl.BlockSpec(memory_space=pltpu.MemorySpace.VMEM),
            pl.BlockSpec(memory_space=pltpu.MemorySpace.VMEM),
            pl.BlockSpec(memory_space=pltpu.MemorySpace.VMEM),
        ),
    )(x.astype(jnp.float32), h0.astype(jnp.float32), c0.astype(jnp.float32),
      w_ih_t, w_hh_t, b_sum, w_fc_row, b_fc_s)

    output = out_slab[:, :1]                                     # (B, 1)
    return output, (h_n, c_n)


def _reference_forward(x, h0, c0, w_ih, w_hh, b_ih, b_hh, w_fc, b_fc):
    """Pure-JAX f32 reference mirroring torch.nn.LSTM single-step + Linear."""
    L, B, H = h0.shape
    cur = x
    h_list, c_list = [], []
    for l in range(L):
        gates = cur @ w_ih[l].T + h0[l] @ w_hh[l].T + b_ih[l] + b_hh[l]
        i = jax.nn.sigmoid(gates[:, 0 * H:1 * H])
        f = jax.nn.sigmoid(gates[:, 1 * H:2 * H])
        g = jnp.tanh(gates[:, 2 * H:3 * H])
        o = jax.nn.sigmoid(gates[:, 3 * H:4 * H])
        c_new = f * c0[l] + i * g
        h_new = o * jnp.tanh(c_new)
        h_list.append(h_new)
        c_list.append(c_new)
        cur = h_new
    out = cur @ w_fc.T + b_fc
    return out, (jnp.stack(h_list), jnp.stack(c_list))


if __name__ == "__main__":
    # model_params (small, tile-friendly): hidden_dim=128, num_layers=2, batch=8
    B, H, L = 8, 128, 2

    key = jax.random.PRNGKey(0)
    ks = jax.random.split(key, 9)
    scale = 1.0 / np.sqrt(H)

    x = jax.random.normal(ks[0], (B, H), dtype=jnp.float32)
    h0 = jax.random.normal(ks[1], (L, B, H), dtype=jnp.float32)
    c0 = jax.random.normal(ks[2], (L, B, H), dtype=jnp.float32)

    w_ih = jax.random.uniform(ks[3], (L, 4 * H, H), minval=-scale, maxval=scale)
    w_hh = jax.random.uniform(ks[4], (L, 4 * H, H), minval=-scale, maxval=scale)
    b_ih = jax.random.uniform(ks[5], (L, 4 * H), minval=-scale, maxval=scale)
    b_hh = jax.random.uniform(ks[6], (L, 4 * H), minval=-scale, maxval=scale)
    w_fc = jax.random.uniform(ks[7], (1, H), minval=-scale, maxval=scale)
    b_fc = jax.random.uniform(ks[8], (1,), minval=-scale, maxval=scale)

    # Parameter packing is done once (not per decode step).
    params = prepare_cycle_decoder_params(w_ih, w_hh, b_ih, b_hh, w_fc, b_fc)

    out, (h_n, c_n) = cycle_decoder_forward(x, h0, c0, params)
    jax.block_until_ready((out, h_n, c_n))

    out_ref, (h_ref, c_ref) = _reference_forward(x, h0, c0, w_ih, w_hh,
                                                 b_ih, b_hh, w_fc, b_fc)

    # bf16 gate-matmul operands -> tolerance relaxed vs. the pure-f32 reference.
    assert jnp.allclose(out, out_ref, atol=5e-2, rtol=5e-2)
    assert jnp.allclose(h_n, h_ref, atol=5e-2, rtol=5e-2)
    assert jnp.allclose(c_n, c_ref, atol=5e-2, rtol=5e-2)
    assert out.shape == (B, 1) and h_n.shape == (L, B, H) and c_n.shape == (L, B, H)

    print("KERNEL_OK")
</pallas_src>

<mosaic_0001>
module attributes {stable_mosaic.version = 11 : i64} {
  func.func @_cycle_decoder_kernel(%arg0: memref<8x128xf32, #tpu.memory_space<vmem>>, %arg1: memref<2x8x128xf32, #tpu.memory_space<vmem>>, %arg2: memref<2x8x128xf32, #tpu.memory_space<vmem>>, %arg3: memref<2x128x512xbf16, #tpu.memory_space<vmem>>, %arg4: memref<2x128x512xbf16, #tpu.memory_space<vmem>>, %arg5: memref<2x1x512xf32, #tpu.memory_space<vmem>>, %arg6: memref<1x128xf32, #tpu.memory_space<vmem>>, %arg7: memref<1xf32, #tpu.memory_space<smem>>, %arg8: memref<2x8x128xf32, #tpu.memory_space<vmem>>, %arg9: memref<2x8x128xf32, #tpu.memory_space<vmem>>, %arg10: memref<8x128xf32, #tpu.memory_space<vmem>>) attributes {dimension_semantics = [], scalar_prefetch = 0 : i64, scratch_operands = 0 : i64, tpu.core_type = #tpu.core_type<tc>} {
    %c0 = arith.constant 0 : index
    %c0_0 = arith.constant 0 : index
    %c0_1 = arith.constant 0 : index
    %0 = vector.load %arg1[%c0, %c0_0, %c0_1] : memref<2x8x128xf32, #tpu.memory_space<vmem>>, vector<1x8x128xf32>
    %1 = vector.shape_cast %0 : vector<1x8x128xf32> to vector<8x128xf32>
    %2 = arith.truncf %1 : vector<8x128xf32> to vector<8x128xbf16>
    %c0_2 = arith.constant 0 : index
    %c0_3 = arith.constant 0 : index
    %c0_4 = arith.constant 0 : index
    %3 = vector.load %arg4[%c0_2, %c0_3, %c0_4] : memref<2x128x512xbf16, #tpu.memory_space<vmem>>, vector<1x128x512xbf16>
    %4 = vector.shape_cast %3 : vector<1x128x512xbf16> to vector<128x512xbf16>
    %cst = arith.constant dense<0.000000e+00> : vector<8x512xf32>
    %5 = tpu.matmul %2, %4, %cst {dimension_numbers = #tpu.dot_dimension_numbers<[1], [0], [0], [1], [0, 0, 1, 1], [], []>} : vector<8x128xbf16>, vector<128x512xbf16>, vector<8x512xf32> -> vector<8x512xf32>
    %c0_5 = arith.constant 0 : index
    %c0_6 = arith.constant 0 : index
    %c0_7 = arith.constant 0 : index
    %6 = vector.load %arg5[%c0_5, %c0_6, %c0_7] : memref<2x1x512xf32, #tpu.memory_space<vmem>>, vector<1x1x512xf32>
    %7 = vector.shape_cast %6 : vector<1x1x512xf32> to vector<1x512xf32>
    %8 = vector.broadcast %7 : vector<1x512xf32> to vector<8x512xf32>
    %9 = arith.addf %5, %8 : vector<8x512xf32>
    %c1 = arith.constant 1 : index
    %c0_8 = arith.constant 0 : index
    %c0_9 = arith.constant 0 : index
    %10 = vector.load %arg1[%c1, %c0_8, %c0_9] : memref<2x8x128xf32, #tpu.memory_space<vmem>>, vector<1x8x128xf32>
    %11 = vector.shape_cast %10 : vector<1x8x128xf32> to vector<8x128xf32>
    %12 = arith.truncf %11 : vector<8x128xf32> to vector<8x128xbf16>
    %c1_10 = arith.constant 1 : index
    %c0_11 = arith.constant 0 : index
    %c0_12 = arith.constant 0 : index
    %13 = vector.load %arg4[%c1_10, %c0_11, %c0_12] : memref<2x128x512xbf16, #tpu.memory_space<vmem>>, vector<1x128x512xbf16>
    %14 = vector.shape_cast %13 : vector<1x128x512xbf16> to vector<128x512xbf16>
    %cst_13 = arith.constant dense<0.000000e+00> : vector<8x512xf32>
    %15 = tpu.matmul %12, %14, %cst_13 {dimension_numbers = #tpu.dot_dimension_numbers<[1], [0], [0], [1], [0, 0, 1, 1], [], []>} : vector<8x128xbf16>, vector<128x512xbf16>, vector<8x512xf32> -> vector<8x512xf32>
    %c1_14 = arith.constant 1 : index
    %c0_15 = arith.constant 0 : index
    %c0_16 = arith.constant 0 : index
    %16 = vector.load %arg5[%c1_14, %c0_15, %c0_16] : memref<2x1x512xf32, #tpu.memory_space<vmem>>, vector<1x1x512xf32>
    %17 = vector.shape_cast %16 : vector<1x1x512xf32> to vector<1x512xf32>
    %18 = vector.broadcast %17 : vector<1x512xf32> to vector<8x512xf32>
    %19 = arith.addf %15, %18 : vector<8x512xf32>
    %c0_17 = arith.constant 0 : index
    %c0_18 = arith.constant 0 : index
    %20 = vector.load %arg0[%c0_17, %c0_18] : memref<8x128xf32, #tpu.memory_space<vmem>>, vector<8x128xf32>
    %21 = arith.truncf %20 : vector<8x128xf32> to vector<8x128xbf16>
    %c0_19 = arith.constant 0 : index
    %c0_20 = arith.constant 0 : index
    %c0_21 = arith.constant 0 : index
    %22 = vector.load %arg3[%c0_19, %c0_20, %c0_21] : memref<2x128x512xbf16, #tpu.memory_space<vmem>>, vector<1x128x512xbf16>
    %23 = vector.shape_cast %22 : vector<1x128x512xbf16> to vector<128x512xbf16>
    %cst_22 = arith.constant dense<0.000000e+00> : vector<8x512xf32>
    %24 = tpu.matmul %21, %23, %cst_22 {dimension_numbers = #tpu.dot_dimension_numbers<[1], [0], [0], [1], [0, 0, 1, 1], [], []>} : vector<8x128xbf16>, vector<128x512xbf16>, vector<8x512xf32> -> vector<8x512xf32>
    %25 = arith.addf %24, %9 : vector<8x512xf32>
    %26 = vector.extract_strided_slice %25 {offsets = [0, 0], sizes = [8, 128], strides = [1, 1]} : vector<8x512xf32> to vector<8x128xf32>
    %27 = arith.negf %26 : vector<8x128xf32>
    %28 = math.exp %27 : vector<8x128xf32>
    %cst_23 = arith.constant 1.000000e+00 : f32
    %29 = vector.broadcast %cst_23 : f32 to vector<8x128xf32>
    %30 = arith.addf %29, %28 : vector<8x128xf32>
    %31 = arith.divf %29, %30 : vector<8x128xf32>
    %32 = vector.extract_strided_slice %25 {offsets = [0, 128], sizes = [8, 128], strides = [1, 1]} : vector<8x512xf32> to vector<8x128xf32>
    %33 = arith.negf %32 : vector<8x128xf32>
    %34 = math.exp %33 : vector<8x128xf32>
    %cst_24 = arith.constant 1.000000e+00 : f32
    %35 = vector.broadcast %cst_24 : f32 to vector<8x128xf32>
    %36 = arith.addf %35, %34 : vector<8x128xf32>
    %37 = arith.divf %35, %36 : vector<8x128xf32>
    %38 = vector.extract_strided_slice %25 {offsets = [0, 256], sizes = [8, 128], strides = [1, 1]} : vector<8x512xf32> to vector<8x128xf32>
    %39 = math.tanh %38 : vector<8x128xf32>
    %40 = vector.extract_strided_slice %25 {offsets = [0, 384], sizes = [8, 128], strides = [1, 1]} : vector<8x512xf32> to vector<8x128xf32>
    %41 = arith.negf %40 : vector<8x128xf32>
    %42 = math.exp %41 : vector<8x128xf32>
    %cst_25 = arith.constant 1.000000e+00 : f32
    %43 = vector.broadcast %cst_25 : f32 to vector<8x128xf32>
    %44 = arith.addf %43, %42 : vector<8x128xf32>
    %45 = arith.divf %43, %44 : vector<8x128xf32>
    %c0_26 = arith.constant 0 : index
    %c0_27 = arith.constant 0 : index
    %c0_28 = arith.constant 0 : index
    %46 = vector.load %arg2[%c0_26, %c0_27, %c0_28] : memref<2x8x128xf32, #tpu.memory_space<vmem>>, vector<1x8x128xf32>
    %47 = vector.shape_cast %46 : vector<1x8x128xf32> to vector<8x128xf32>
    %48 = arith.mulf %37, %47 : vector<8x128xf32>
    %49 = arith.mulf %31, %39 : vector<8x128xf32>
    %50 = arith.addf %48, %49 : vector<8x128xf32>
    %51 = math.tanh %50 : vector<8x128xf32>
    %52 = arith.mulf %45, %51 : vector<8x128xf32>
    %c0_29 = arith.constant 0 : index
    %c0_30 = arith.constant 0 : index
    %c0_31 = arith.constant 0 : index
    %53 = vector.load %arg8[%c0_29, %c0_30, %c0_31] : memref<2x8x128xf32, #tpu.memory_space<vmem>>, vector<1x8x128xf32>
    %54 = vector.shape_cast %53 : vector<1x8x128xf32> to vector<8x128xf32>
    %55 = vector.shape_cast %52 : vector<8x128xf32> to vector<1x8x128xf32>
    tpu.vector_store %arg8[%c0_29, %c0_30, %c0_31], %55 {strides = array<i32>} : memref<2x8x128xf32, #tpu.memory_space<vmem>>, vector<1x8x128xf32>,
    %c0_32 = arith.constant 0 : index
    %c0_33 = arith.constant 0 : index
    %c0_34 = arith.constant 0 : index
    %56 = vector.load %arg9[%c0_32, %c0_33, %c0_34] : memref<2x8x128xf32, #tpu.memory_space<vmem>>, vector<1x8x128xf32>
    %57 = vector.shape_cast %56 : vector<1x8x128xf32> to vector<8x128xf32>
    %58 = vector.shape_cast %50 : vector<8x128xf32> to vector<1x8x128xf32>
    tpu.vector_store %arg9[%c0_32, %c0_33, %c0_34], %58 {strides = array<i32>} : memref<2x8x128xf32, #tpu.memory_space<vmem>>, vector<1x8x128xf32>,
    %59 = arith.truncf %52 : vector<8x128xf32> to vector<8x128xbf16>
    %c1_35 = arith.constant 1 : index
    %c0_36 = arith.constant 0 : index
    %c0_37 = arith.constant 0 : index
    %60 = vector.load %arg3[%c1_35, %c0_36, %c0_37] : memref<2x128x512xbf16, #tpu.memory_space<vmem>>, vector<1x128x512xbf16>
    %61 = vector.shape_cast %60 : vector<1x128x512xbf16> to vector<128x512xbf16>
    %cst_38 = arith.constant dense<0.000000e+00> : vector<8x512xf32>
    %62 = tpu.matmul %59, %61, %cst_38 {dimension_numbers = #tpu.dot_dimension_numbers<[1], [0], [0], [1], [0, 0, 1, 1], [], []>} : vector<8x128xbf16>, vector<128x512xbf16>, vector<8x512xf32> -> vector<8x512xf32>
    %63 = arith.addf %62, %19 : vector<8x512xf32>
    %64 = vector.extract_strided_slice %63 {offsets = [0, 0], sizes = [8, 128], strides = [1, 1]} : vector<8x512xf32> to vector<8x128xf32>
    %65 = arith.negf %64 : vector<8x128xf32>
    %66 = math.exp %65 : vector<8x128xf32>
    %cst_39 = arith.constant 1.000000e+00 : f32
    %67 = vector.broadcast %cst_39 : f32 to vector<8x128xf32>
    %68 = arith.addf %67, %66 : vector<8x128xf32>
    %69 = arith.divf %67, %68 : vector<8x128xf32>
    %70 = vector.extract_strided_slice %63 {offsets = [0, 128], sizes = [8, 128], strides = [1, 1]} : vector<8x512xf32> to vector<8x128xf32>
    %71 = arith.negf %70 : vector<8x128xf32>
    %72 = math.exp %71 : vector<8x128xf32>
    %cst_40 = arith.constant 1.000000e+00 : f32
    %73 = vector.broadcast %cst_40 : f32 to vector<8x128xf32>
    %74 = arith.addf %73, %72 : vector<8x128xf32>
    %75 = arith.divf %73, %74 : vector<8x128xf32>
    %76 = vector.extract_strided_slice %63 {offsets = [0, 256], sizes = [8, 128], strides = [1, 1]} : vector<8x512xf32> to vector<8x128xf32>
    %77 = math.tanh %76 : vector<8x128xf32>
    %78 = vector.extract_strided_slice %63 {offsets = [0, 384], sizes = [8, 128], strides = [1, 1]} : vector<8x512xf32> to vector<8x128xf32>
    %79 = arith.negf %78 : vector<8x128xf32>
    %80 = math.exp %79 : vector<8x128xf32>
    %cst_41 = arith.constant 1.000000e+00 : f32
    %81 = vector.broadcast %cst_41 : f32 to vector<8x128xf32>
    %82 = arith.addf %81, %80 : vector<8x128xf32>
    %83 = arith.divf %81, %82 : vector<8x128xf32>
    %c1_42 = arith.constant 1 : index
    %c0_43 = arith.constant 0 : index
    %c0_44 = arith.constant 0 : index
    %84 = vector.load %arg2[%c1_42, %c0_43, %c0_44] : memref<2x8x128xf32, #tpu.memory_space<vmem>>, vector<1x8x128xf32>
    %85 = vector.shape_cast %84 : vector<1x8x128xf32> to vector<8x128xf32>
    %86 = arith.mulf %75, %85 : vector<8x128xf32>
    %87 = arith.mulf %69, %77 : vector<8x128xf32>
    %88 = arith.addf %86, %87 : vector<8x128xf32>
    %89 = math.tanh %88 : vector<8x128xf32>
    %90 = arith.mulf %83, %89 : vector<8x128xf32>
    %c1_45 = arith.constant 1 : index
    %c0_46 = arith.constant 0 : index
    %c0_47 = arith.constant 0 : index
    %91 = vector.load %arg8[%c1_45, %c0_46, %c0_47] : memref<2x8x128xf32, #tpu.memory_space<vmem>>, vector<1x8x128xf32>
    %92 = vector.shape_cast %91 : vector<1x8x128xf32> to vector<8x128xf32>
    %93 = vector.shape_cast %90 : vector<8x128xf32> to vector<1x8x128xf32>
    tpu.vector_store %arg8[%c1_45, %c0_46, %c0_47], %93 {strides = array<i32>} : memref<2x8x128xf32, #tpu.memory_space<vmem>>, vector<1x8x128xf32>,
    %c1_48 = arith.constant 1 : index
    %c0_49 = arith.constant 0 : index
    %c0_50 = arith.constant 0 : index
    %94 = vector.load %arg9[%c1_48, %c0_49, %c0_50] : memref<2x8x128xf32, #tpu.memory_space<vmem>>, vector<1x8x128xf32>
    %95 = vector.shape_cast %94 : vector<1x8x128xf32> to vector<8x128xf32>
    %96 = vector.shape_cast %88 : vector<8x128xf32> to vector<1x8x128xf32>
    tpu.vector_store %arg9[%c1_48, %c0_49, %c0_50], %96 {strides = array<i32>} : memref<2x8x128xf32, #tpu.memory_space<vmem>>, vector<1x8x128xf32>,
    %c0_51 = arith.constant 0 : index
    %c0_52 = arith.constant 0 : index
    %97 = vector.load %arg6[%c0_51, %c0_52] : memref<1x128xf32, #tpu.memory_space<vmem>>, vector<1x128xf32>
    %98 = vector.broadcast %97 : vector<1x128xf32> to vector<8x128xf32>
    %99 = arith.mulf %90, %98 : vector<8x128xf32>
    %cst_53 = arith.constant dense<0.000000e+00> : vector<8xf32>
    %100 = vector.multi_reduction <add>, %99, %cst_53 [1] : vector<8x128xf32> to vector<8xf32>
    %101 = vector.shape_cast %100 : vector<8xf32> to vector<8x1xf32>
    %c0_54 = arith.constant 0 : index
    %102 = memref.load %arg7[%c0_54] : memref<1xf32, #tpu.memory_space<smem>>
    %103 = vector.broadcast %102 : f32 to vector<8x1xf32>
    %104 = arith.addf %101, %103 : vector<8x1xf32>
    %105 = vector.shape_cast %104 : vector<8x1xf32> to vector<8x1xf32>
    %106 = vector.broadcast %105 : vector<8x1xf32> to vector<8x128xf32>
    %c0_55 = arith.constant 0 : index
    %c0_56 = arith.constant 0 : index
    %107 = vector.load %arg10[%c0_55, %c0_56] : memref<8x128xf32, #tpu.memory_space<vmem>>, vector<8x128xf32>
    tpu.vector_store %arg10[%c0_55, %c0_56], %106 {strides = array<i32>} : memref<8x128xf32, #tpu.memory_space<vmem>>, vector<8x128xf32>,
    return
  }
}

</mosaic_0001>

<llo_original>
// kernel: cycle_decoder_forward.1
$region0: #{cycle_decoder_forward.1}
  #allocation0 [shape = 'u32[]', space=smem, size = 0x4, offset = 0x4, fixed_abs, tag = 'smem constant byte address 0x4 - core index']
  #allocation1 [shape = 'u32[144,128]{1,0:T(1,128)}', space=vmem, size = 0x12000, scoped, tag = 'internal scratch']
  #allocation2 [shape = 'f32[1]{0:T(128)S(6)}', space=smem, size = 0x200, scoped, tag = 'scoped memory for cycle_decoder_forward.1']
  %s0 = inlined_call_operand.hbm [shape: f32[8,128], index: 0, kind: input, shape index: {}]
  %s1 = inlined_call_operand.hbm [shape: f32[2,8,128], index: 1, kind: input, shape index: {}]
  %s2 = inlined_call_operand.hbm [shape: f32[2,8,128], index: 2, kind: input, shape index: {}]
  %s3 = inlined_call_operand.hbm [shape: bf16[2,128,512], index: 3, kind: input, shape index: {}]
  %s4 = inlined_call_operand.hbm [shape: bf16[2,128,512], index: 4, kind: input, shape index: {}]
  %s5 = inlined_call_operand.vmem [shape: f32[2,1,512], index: 5, kind: input, shape index: {}]
  %s6 = inlined_call_operand.vmem [shape: f32[1,128], index: 6, kind: input, shape index: {}]
  %s7 = inlined_call_operand.<no memory space> [shape: f32[1], index: 7, kind: input, shape index: {}]
  %s8 = inlined_call_operand.hbm [shape: f32[2,8,128], index: 8, kind: output, shape index: {0}]
  %s9 = inlined_call_operand.hbm [shape: f32[2,8,128], index: 9, kind: output, shape index: {1}]
  %s10 = inlined_call_operand.vmem [shape: f32[8,128], index: 10, kind: output, shape index: {2}]
  %11 = xla_tuple %s8, %s9, %s10
  %s12 = sld [smem:[#allocation0]]
  $region78: #{cycle_decoder_forward.1} parent=0
    _
  %s14 = ssub.s32 1, %s12
  %s15 = scalar_select 0, %s14, %s12
  %16 = sst [smem:[#allocation2]] %s7
  $region1: #{cycle_decoder_forward.1} parent=0
    #allocation3 [shape = 'u8[4096]{0}', space=vmem, size = 0x1000, scoped, tag = 'input window, operand 0, single buffered']
    #allocation4 [shape = 's32[1]{0}', space=sflag, size = 0x4, scoped, tag = 'scoped memory for cycle_decoder_forward.1']
    #allocation5 [shape = 's32[1]{0}', space=sflag, size = 0x4, scoped, tag = 'scoped memory for cycle_decoder_forward.1']
    #allocation6 [shape = 'u8[8192]{0}', space=vmem, size = 0x2000, scoped, tag = 'input window, operand 1, single buffered']
    #allocation7 [shape = 's32[1]{0}', space=sflag, size = 0x4, scoped, tag = 'scoped memory for cycle_decoder_forward.1']
    #allocation8 [shape = 'u8[8192]{0}', space=vmem, size = 0x2000, scoped, tag = 'input window, operand 2, single buffered']
    #allocation9 [shape = 'u8[262144]{0}', space=vmem, size = 0x40000, scoped, tag = 'input window, operand 3, single buffered']
    #allocation10 [shape = 's32[1]{0}', space=sflag, size = 0x4, scoped, tag = 'scoped memory for cycle_decoder_forward.1']
    #allocation11 [shape = 'u8[262144]{0}', space=vmem, size = 0x40000, scoped, tag = 'input window, operand 4, single buffered']
    #allocation12 [shape = 'u8[8192]{0}', space=vmem, size = 0x2000, scoped, tag = 'output window, operand 0, single buffered']
    #allocation13 [shape = 'u8[8192]{0}', space=vmem, size = 0x2000, scoped, tag = 'output window, operand 1, single buffered']
    #allocation14 [shape = 's32[1]{0}', space=sflag, size = 0x4, scoped, tag = 'scoped memory for cycle_decoder_forward.1']
    %17 = vsyncpa [#allocation4], 0
    %18 = vsyncpa [#allocation7], 0
    %19 = vsyncpa [#allocation10], 0
    %20 = vsyncpa [#allocation5], 0
    %21 = vsyncpa [#allocation14], 0
    // Predicated region
    $region2: #{cycle_decoder_forward.1} parent=1 // pred_check
      _
    $region3: #{cycle_decoder_forward.1} parent=1 // pred_check_branch
      %23 = sbr.rel (0) target = $region5
    $region4: #{cycle_decoder_forward.1} parent=1 // pred_region
      %s25 = ssub.s32 128, 128
      %26 = vsyncadd [#allocation4], %s25
      %s28 = sshll.u32 [#allocation3], 4
      %s29 = int_to_ptr.vmem [resolvable:$true] %s28
      %31 = dma.hbm_to_vmem [thread:$0]  %s0, 128, %s29, [#allocation4]
    $region5: #{cycle_decoder_forward.1} parent=1 // pred_fallthru
      _
    // Predicated region
    $region6: #{cycle_decoder_forward.1} parent=1 // pred_check
      _
    $region7: #{cycle_decoder_forward.1} parent=1 // pred_check_branch
      %33 = sbr.rel (0) target = $region9
    $region8: #{cycle_decoder_forward.1} parent=1 // pred_region
      %s35 = ssub.s32 256, 256
      %36 = vsyncadd [#allocation7], %s35
      %s37 = sshll.u32 [#allocation6], 4
      %s38 = int_to_ptr.vmem [resolvable:$true] %s37
      %43 = dma.hbm_to_vmem [thread:$0]  %s1, 256, %s38, [#allocation7], 128, 128, 8
    $region9: #{cycle_decoder_forward.1} parent=1 // pred_fallthru
      _
    // Predicated region
    $region10: #{cycle_decoder_forward.1} parent=1 // pred_check
      _
    $region11: #{cycle_decoder_forward.1} parent=1 // pred_check_branch
      %45 = sbr.rel (0) target = $region13
    $region12: #{cycle_decoder_forward.1} parent=1 // pred_region
      %s47 = ssub.s32 256, 256
      %48 = vsyncadd [#allocation7], %s47
      %s49 = sshll.u32 [#allocation8], 4
      %s50 = int_to_ptr.vmem [resolvable:$true] %s49
      %55 = dma.hbm_to_vmem [thread:$0]  %s2, 256, %s50, [#allocation7], 128, 128, 8
    $region13: #{cycle_decoder_forward.1} parent=1 // pred_fallthru
      _
    // Predicated region
    $region14: #{cycle_decoder_forward.1} parent=1 // pred_check
      _
    $region15: #{cycle_decoder_forward.1} parent=1 // pred_check_branch
      %57 = sbr.rel (0) target = $region17
    $region16: #{cycle_decoder_forward.1} parent=1 // pred_region
      %s59 = ssub.s32 8192, 8192
      %60 = vsyncadd [#allocation10], %s59
      %s61 = sshll.u32 [#allocation9], 4
      %s62 = int_to_ptr.vmem [resolvable:$true] %s61
      %67 = dma.hbm_to_vmem [thread:$0]  %s3, 8192, %s62, [#allocation10], 256, 256, 16
    $region17: #{cycle_decoder_forward.1} parent=1 // pred_fallthru
      _
    // Predicated region
    $region18: #{cycle_decoder_forward.1} parent=1 // pred_check
      _
    $region19: #{cycle_decoder_forward.1} parent=1 // pred_check_branch
      %69 = sbr.rel (0) target = $region21
    $region20: #{cycle_decoder_forward.1} parent=1 // pred_region
      %s71 = ssub.s32 8192, 8192
      %72 = vsyncadd [#allocation10], %s71
      %s73 = sshll.u32 [#allocation11], 4
      %s74 = int_to_ptr.vmem [resolvable:$true] %s73
      %79 = dma.hbm_to_vmem [thread:$0]  %s4, 8192, %s74, [#allocation10], 256, 256, 16
    $region21: #{cycle_decoder_forward.1} parent=1 // pred_fallthru
      _
    // Predicated region
    $region22: #{cycle_decoder_forward.1} parent=1 // pred_check
      _
    $region23: #{cycle_decoder_forward.1} parent=1 // pred_check_branch
      %81 = sbr.rel (0) target = $region25
    $region24: #{cycle_decoder_forward.1} parent=1 // pred_region
      _
    $region25: #{cycle_decoder_forward.1} parent=1 // pred_fallthru
      _
    // Predicated region
    $region26: #{cycle_decoder_forward.1} parent=1 // pred_check
      _
    $region27: #{cycle_decoder_forward.1} parent=1 // pred_check_branch
      %83 = sbr.rel (0) target = $region29
    $region28: #{cycle_decoder_forward.1} parent=1 // pred_region
      _
    $region29: #{cycle_decoder_forward.1} parent=1 // pred_fallthru
      _
    // Predicated region
    $region30: #{cycle_decoder_forward.1} parent=1 // pred_check
      _
    $region31: #{cycle_decoder_forward.1} parent=1 // pred_check_branch
      %85 = sbr.rel (0) target = $region33
    $region32: #{cycle_decoder_forward.1} parent=1 // pred_region
      _
    $region33: #{cycle_decoder_forward.1} parent=1 // pred_fallthru
      _
    // Predicated region
    $region34: #{cycle_decoder_forward.1} parent=1 // pred_check
      _
    $region35: #{cycle_decoder_forward.1} parent=1 // pred_check_branch
      %87 = sbr.rel (0) target = $region37
    $region36: #{cycle_decoder_forward.1} parent=1 // pred_region
      %88 = dma.done [#allocation4], 128
    $region37: #{cycle_decoder_forward.1} parent=1 // pred_fallthru
      _
    // Predicated region
    $region38: #{cycle_decoder_forward.1} parent=1 // pred_check
      _
    $region39: #{cycle_decoder_forward.1} parent=1 // pred_check_branch
      %90 = sbr.rel (0) target = $region41
    $region40: #{cycle_decoder_forward.1} parent=1 // pred_region
      %91 = dma.done [#allocation7], 256
    $region41: #{cycle_decoder_forward.1} parent=1 // pred_fallthru
      _
    // Predicated region
    $region42: #{cycle_decoder_forward.1} parent=1 // pred_check
      _
    $region43: #{cycle_decoder_forward.1} parent=1 // pred_check_branch
      %93 = sbr.rel (0) target = $region45
    $region44: #{cycle_decoder_forward.1} parent=1 // pred_region
      %94 = dma.done [#allocation7], 256
    $region45: #{cycle_decoder_forward.1} parent=1 // pred_fallthru
      _
    // Predicated region
    $region46: #{cycle_decoder_forward.1} parent=1 // pred_check
      _
    $region47: #{cycle_decoder_forward.1} parent=1 // pred_check_branch
      %96 = sbr.rel (0) target = $region49
    $region48: #{cycle_decoder_forward.1} parent=1 // pred_region
      %97 = dma.done [#allocation10], 8192
    $region49: #{cycle_decoder_forward.1} parent=1 // pred_fallthru
      _
    // Predicated region
    $region50: #{cycle_decoder_forward.1} parent=1 // pred_check
      _
    $region51: #{cycle_decoder_forward.1} parent=1 // pred_check_branch
      %99 = sbr.rel (0) target = $region53
    $region52: #{cycle_decoder_forward.1} parent=1 // pred_region
      %100 = dma.done [#allocation10], 8192
    $region53: #{cycle_decoder_forward.1} parent=1 // pred_fallthru
      _
    %v102 = vld [vmem:[#allocation6] sm:$0xff]
    %v103 = vpack.c.bf16 %v102, %v102
    %v104 = vld [vmem:[#allocation11] sm:$0xff]
    %v105 = vld [vmem:[#allocation11 + $0x8] sm:$0xff]
    %v106 = vld [vmem:[#allocation11 + $0x10] sm:$0xff]
    %v107 = vld [vmem:[#allocation11 + $0x18] sm:$0xff]
    %v108 = vld [vmem:[#allocation11 + $0x20] sm:$0xff]
    %v109 = vld [vmem:[#allocation11 + $0x28] sm:$0xff]
    %v110 = vld [vmem:[#allocation11 + $0x30] sm:$0xff]
    %v111 = vld [vmem:[#allocation11 + $0x38] sm:$0xff]
    %v112 = vld [vmem:[#allocation11 + $0x40] sm:$0xff]
    %v113 = vld [vmem:[#allocation11 + $0x48] sm:$0xff]
    %v114 = vld [vmem:[#allocation11 + $0x50] sm:$0xff]
    %v115 = vld [vmem:[#allocation11 + $0x58] sm:$0xff]
    %v116 = vld [vmem:[#allocation11 + $0x60] sm:$0xff]
    %v117 = vld [vmem:[#allocation11 + $0x68] sm:$0xff]
    %v118 = vld [vmem:[#allocation11 + $0x70] sm:$0xff]
    %v119 = vld [vmem:[#allocation11 + $0x78] sm:$0xff]
    %v120 = vld [vmem:[#allocation11 + $0x80] sm:$0xff]
    %v121 = vld [vmem:[#allocation11 + $0x88] sm:$0xff]
    %v122 = vld [vmem:[#allocation11 + $0x90] sm:$0xff]
    %v123 = vld [vmem:[#allocation11 + $0x98] sm:$0xff]
    %v124 = vld [vmem:[#allocation11 + $0xa0] sm:$0xff]
    %v125 = vld [vmem:[#allocation11 + $0xa8] sm:$0xff]
    %v126 = vld [vmem:[#allocation11 + $0xb0] sm:$0xff]
    %v127 = vld [vmem:[#allocation11 + $0xb8] sm:$0xff]
    %v128 = vld [vmem:[#allocation11 + $0xc0] sm:$0xff]
    %v129 = vld [vmem:[#allocation11 + $0xc8] sm:$0xff]
    %v130 = vld [vmem:[#allocation11 + $0xd0] sm:$0xff]
    %v131 = vld [vmem:[#allocation11 + $0xd8] sm:$0xff]
    %v132 = vld [vmem:[#allocation11 + $0xe0] sm:$0xff]
    %v133 = vld [vmem:[#allocation11 + $0xe8] sm:$0xff]
    %v134 = vld [vmem:[#allocation11 + $0xf0] sm:$0xff]
    %v135 = vld [vmem:[#allocation11 + $0xf8] sm:$0xff]
    %v136 = vld [vmem:[%s5] sm:$0xf]
    %v138 = vlaneseq
    %v139 = vshrl.u32 %v138, 7
    %v140 = vsub.s32 0, %v139
    %v141 = vrot.slane %v136, %v140
    %v142 = vlaneseq
    %v143 = vshrl.u32 %v142, 7
    %v144 = vsub.s32 1, %v143
    %v145 = vrot.slane %v136, %v144
    %v146 = vlaneseq
    %v147 = vshrl.u32 %v146, 7
    %v148 = vsub.s32 2, %v147
    %v149 = vrot.slane %v136, %v148
    %v150 = vlaneseq
    %v151 = vshrl.u32 %v150, 7
    %v152 = vsub.s32 3, %v151
    %v153 = vrot.slane %v136, %v152
    %v190 = vunpack.c.l.b16 %v104
    %v191 = vunpack.c.h.b16 %v104
    %v192 = vunpack.c.l.b16 %v105
    %v193 = vunpack.c.h.b16 %v105
    %v194 = vunpack.c.l.b16 %v106
    %v195 = vunpack.c.h.b16 %v106
    %v196 = vunpack.c.l.b16 %v107
    %v197 = vunpack.c.h.b16 %v107
    %v198 = vunpack.c.l.b16 %v108
    %v199 = vunpack.c.h.b16 %v108
    %v200 = vunpack.c.l.b16 %v109
    %v201 = vunpack.c.h.b16 %v109
    %v202 = vunpack.c.l.b16 %v110
    %v203 = vunpack.c.h.b16 %v110
    %v204 = vunpack.c.l.b16 %v111
    %v205 = vunpack.c.h.b16 %v111
    %v206 = vunpack.c.l.b16 %v112
    %v207 = vunpack.c.h.b16 %v112
    %v208 = vunpack.c.l.b16 %v113
    %v209 = vunpack.c.h.b16 %v113
    %v210 = vunpack.c.l.b16 %v114
    %v211 = vunpack.c.h.b16 %v114
    %v212 = vunpack.c.l.b16 %v115
    %v213 = vunpack.c.h.b16 %v115
    %v214 = vunpack.c.l.b16 %v116
    %v215 = vunpack.c.h.b16 %v116
    %v216 = vunpack.c.l.b16 %v117
    %v217 = vunpack.c.h.b16 %v117
    %v218 = vunpack.c.l.b16 %v118
    %v219 = vunpack.c.h.b16 %v118
    %v220 = vunpack.c.l.b16 %v119
    %v221 = vunpack.c.h.b16 %v119
    %v222 = vunpack.c.l.b16 %v120
    %v223 = vunpack.c.h.b16 %v120
    %v224 = vunpack.c.l.b16 %v121
    %v225 = vunpack.c.h.b16 %v121
    %v226 = vunpack.c.l.b16 %v122
    %v227 = vunpack.c.h.b16 %v122
    %v228 = vunpack.c.l.b16 %v123
    %v229 = vunpack.c.h.b16 %v123
    %v230 = vunpack.c.l.b16 %v124
    %v231 = vunpack.c.h.b16 %v124
    %v232 = vunpack.c.l.b16 %v125
    %v233 = vunpack.c.h.b16 %v125
    %v234 = vunpack.c.l.b16 %v126
    %v235 = vunpack.c.h.b16 %v126
    %v236 = vunpack.c.l.b16 %v127
    %v237 = vunpack.c.h.b16 %v127
    %v238 = vunpack.c.l.b16 %v128
    %v239 = vunpack.c.h.b16 %v128
    %v240 = vunpack.c.l.b16 %v129
    %v241 = vunpack.c.h.b16 %v129
    %v242 = vunpack.c.l.b16 %v130
    %v243 = vunpack.c.h.b16 %v130
    %v244 = vunpack.c.l.b16 %v131
    %v245 = vunpack.c.h.b16 %v131
    %v246 = vunpack.c.l.b16 %v132
    %v247 = vunpack.c.h.b16 %v132
    %v248 = vunpack.c.l.b16 %v133
    %v249 = vunpack.c.h.b16 %v133
    %v250 = vunpack.c.l.b16 %v134
    %v251 = vunpack.c.h.b16 %v134
    %v252 = vunpack.c.l.b16 %v135
    %v253 = vunpack.c.h.b16 %v135
    %v254 = vpack.c.b16 %v194, %v190
    %v255 = vpack.c.b16 %v195, %v191
    %v256 = vpack.c.b16 %v196, %v192
    %v257 = vpack.c.b16 %v197, %v193
    %v258 = vpack.c.b16 %v202, %v198
    %v259 = vpack.c.b16 %v203, %v199
    %v260 = vpack.c.b16 %v204, %v200
    %v261 = vpack.c.b16 %v205, %v201
    %v262 = vpack.c.b16 %v210, %v206
    %v263 = vpack.c.b16 %v211, %v207
    %v264 = vpack.c.b16 %v212, %v208
    %v265 = vpack.c.b16 %v213, %v209
    %v266 = vpack.c.b16 %v218, %v214
    %v267 = vpack.c.b16 %v219, %v215
    %v268 = vpack.c.b16 %v220, %v216
    %v269 = vpack.c.b16 %v221, %v217
    %v270 = vpack.c.b16 %v226, %v222
    %v271 = vpack.c.b16 %v227, %v223
    %v272 = vpack.c.b16 %v228, %v224
    %v273 = vpack.c.b16 %v229, %v225
    %v274 = vpack.c.b16 %v234, %v230
    %v275 = vpack.c.b16 %v235, %v231
    %v276 = vpack.c.b16 %v236, %v232
    %v277 = vpack.c.b16 %v237, %v233
    %v278 = vpack.c.b16 %v242, %v238
    %v279 = vpack.c.b16 %v243, %v239
    %v280 = vpack.c.b16 %v244, %v240
    %v281 = vpack.c.b16 %v245, %v241
    %v282 = vpack.c.b16 %v250, %v246
    %v283 = vpack.c.b16 %v251, %v247
    %v284 = vpack.c.b16 %v252, %v248
    %v285 = vpack.c.b16 %v253, %v249
    %318 = vmatprep.subr.bf16.mxu0 %v255
    %319 = vmatpush1.bf16.msra.mxu0 %v254
    %320 = vmatprep.subr.bf16.mxu0 %v259
    %321 = vmatpush1.bf16.msra.mxu0 %v258
    %322 = vmatprep.subr.bf16.mxu0 %v263
    %323 = vmatpush1.bf16.msra.mxu0 %v262
    %324 = vmatprep.subr.bf16.mxu0 %v267
    %325 = vmatpush1.bf16.msra.mxu0 %v266
    %326 = vmatprep.subr.bf16.mxu0 %v271
    %327 = vmatpush1.bf16.msra.mxu0 %v270
    %328 = vmatprep.subr.bf16.mxu0 %v275
    %329 = vmatpush1.bf16.msra.mxu0 %v274
    %330 = vmatprep.subr.bf16.mxu0 %v279
    %331 = vmatpush1.bf16.msra.mxu0 %v278
    %332 = vmatprep.subr.bf16.mxu0 %v283
    %333 = vmatpush1.bf16.msra.mxu0 %v282
    %334 = vmatprep.subr.bf16.mxu0 0
    %335 = vmatpush1.bf16.msra.mxu0 0
    %336 = vmatprep.subr.bf16.mxu0 0
    %337 = vmatpush1.bf16.msra.mxu0 0
    %338 = vmatprep.subr.bf16.mxu0 0
    %339 = vmatpush1.bf16.msra.mxu0 0
    %340 = vmatprep.subr.bf16.mxu0 0
    %341 = vmatpush1.bf16.msra.mxu0 0
    %342 = vmatprep.subr.bf16.mxu0 0
    %343 = vmatpush1.bf16.msra.mxu0 0
    %344 = vmatprep.subr.bf16.mxu0 0
    %345 = vmatpush1.bf16.msra.mxu0 0
    %346 = vmatprep.subr.bf16.mxu0 0
    %347 = vmatpush1.bf16.msra.mxu0 0
    %348 = vmatprep.subr.bf16.mxu0 0
    %349 = vmatpush1.bf16.msra.mxu0 0
    %350 = vmatprep.mubr.bf16.mxu0 0
    %351 = vmatmul.mubr.bf16.gmra.mrb[0].mxu0 %v103
    %v352 = vpop.f32.mrb[0].mxu0
    %v353 = vadd.f32 %v141, %v352
    %v354 = vpop.f32.mrb[0].mxu0
    %v355 = vadd.f32 %v145, %v354
    %v356 = vpop.f32.mrb[0].mxu0
    %v357 = vpop.f32.mrb[0].mxu0
    %358 = vdwg.mxu0
    %359 = vmatprep.subr.bf16.mxu0 %v257
    %360 = vmatpush1.bf16.msra.mxu0 %v256
    %361 = vmatprep.subr.bf16.mxu0 %v261
    %362 = vmatpush1.bf16.msra.mxu0 %v260
    %363 = vmatprep.subr.bf16.mxu0 %v265
    %364 = vmatpush1.bf16.msra.mxu0 %v264
    %365 = vmatprep.subr.bf16.mxu0 %v269
    %366 = vmatpush1.bf16.msra.mxu0 %v268
    %367 = vmatprep.subr.bf16.mxu0 %v273
    %368 = vmatpush1.bf16.msra.mxu0 %v272
    %369 = vmatprep.subr.bf16.mxu0 %v277
    %370 = vmatpush1.bf16.msra.mxu0 %v276
    %371 = vmatprep.subr.bf16.mxu0 %v281
    %372 = vmatpush1.bf16.msra.mxu0 %v280
    %373 = vmatprep.subr.bf16.mxu0 %v285
    %374 = vmatpush1.bf16.msra.mxu0 %v284
    %375 = vmatprep.subr.bf16.mxu0 0
    %376 = vmatpush1.bf16.msra.mxu0 0
    %377 = vmatprep.subr.bf16.mxu0 0
    %378 = vmatpush1.bf16.msra.mxu0 0
    %379 = vmatprep.subr.bf16.mxu0 0
    %380 = vmatpush1.bf16.msra.mxu0 0
    %381 = vmatprep.subr.bf16.mxu0 0
    %382 = vmatpush1.bf16.msra.mxu0 0
    %383 = vmatprep.subr.bf16.mxu0 0
    %384 = vmatpush1.bf16.msra.mxu0 0
    %385 = vmatprep.subr.bf16.mxu0 0
    %386 = vmatpush1.bf16.msra.mxu0 0
    %387 = vmatprep.subr.bf16.mxu0 0
    %388 = vmatpush1.bf16.msra.mxu0 0
    %389 = vmatprep.subr.bf16.mxu0 0
    %390 = vmatpush1.bf16.msra.mxu0 0
    %391 = vmatprep.mubr.bf16.mxu0 0
    %392 = vmatmul.mubr.bf16.gmra.mrb[0].mxu0 %v103
    %v393 = vpop.f32.mrb[0].mxu0
    %v394 = vadd.f32 %v149, %v393
    %v395 = vpop.f32.mrb[0].mxu0
    %v396 = vadd.f32 %v153, %v395
    %v397 = vpop.f32.mrb[0].mxu0
    %v398 = vpop.f32.mrb[0].mxu0
    %399 = vdwg.mxu0
    %s400 = scalar_lea.vmem [#allocation6], 8
    %v401 = vld [vmem:[%s400] sm:$0xff]
    %v402 = vpack.c.bf16 %v401, %v401
    %s403 = scalar_lea.vmem [#allocation11], 256
    %v404 = vld [vmem:[%s403] sm:$0xff]
    %v405 = vld [vmem:[%s403 + $0x8] sm:$0xff]
    %v406 = vld [vmem:[%s403 + $0x10] sm:$0xff]
    %v407 = vld [vmem:[%s403 + $0x18] sm:$0xff]
    %v408 = vld [vmem:[%s403 + $0x20] sm:$0xff]
    %v409 = vld [vmem:[%s403 + $0x28] sm:$0xff]
    %v410 = vld [vmem:[%s403 + $0x30] sm:$0xff]
    %v411 = vld [vmem:[%s403 + $0x38] sm:$0xff]
    %v412 = vld [vmem:[%s403 + $0x40] sm:$0xff]
    %v413 = vld [vmem:[%s403 + $0x48] sm:$0xff]
    %v414 = vld [vmem:[%s403 + $0x50] sm:$0xff]
    %v415 = vld [vmem:[%s403 + $0x58] sm:$0xff]
    %v416 = vld [vmem:[%s403 + $0x60] sm:$0xff]
    %v417 = vld [vmem:[%s403 + $0x68] sm:$0xff]
    %v418 = vld [vmem:[%s403 + $0x70] sm:$0xff]
    %v419 = vld [vmem:[%s403 + $0x78] sm:$0xff]
    %v420 = vld [vmem:[%s403 + $0x80] sm:$0xff]
    %v421 = vld [vmem:[%s403 + $0x88] sm:$0xff]
    %v422 = vld [vmem:[%s403 + $0x90] sm:$0xff]
    %v423 = vld [vmem:[%s403 + $0x98] sm:$0xff]
    %v424 = vld [vmem:[%s403 + $0xa0] sm:$0xff]
    %v425 = vld [vmem:[%s403 + $0xa8] sm:$0xff]
    %v426 = vld [vmem:[%s403 + $0xb0] sm:$0xff]
    %v427 = vld [vmem:[%s403 + $0xb8] sm:$0xff]
    %v428 = vld [vmem:[%s403 + $0xc0] sm:$0xff]
    %v429 = vld [vmem:[%s403 + $0xc8] sm:$0xff]
    %v430 = vld [vmem:[%s403 + $0xd0] sm:$0xff]
    %v431 = vld [vmem:[%s403 + $0xd8] sm:$0xff]
    %v432 = vld [vmem:[%s403 + $0xe0] sm:$0xff]
    %v433 = vld [vmem:[%s403 + $0xe8] sm:$0xff]
    %v434 = vld [vmem:[%s403 + $0xf0] sm:$0xff]
    %v435 = vld [vmem:[%s403 + $0xf8] sm:$0xff]
    %s436 = scalar_lea.vmem %s5, 4
    %v437 = vld [vmem:[%s436] sm:$0xf]
    %v439 = vlaneseq
    %v440 = vshrl.u32 %v439, 7
    %v441 = vsub.s32 0, %v440
    %v442 = vrot.slane %v437, %v441
    %v443 = vlaneseq
    %v444 = vshrl.u32 %v443, 7
    %v445 = vsub.s32 1, %v444
    %v446 = vrot.slane %v437, %v445
    %v447 = vlaneseq
    %v448 = vshrl.u32 %v447, 7
    %v449 = vsub.s32 2, %v448
    %v450 = vrot.slane %v437, %v449
    %v451 = vlaneseq
    %v452 = vshrl.u32 %v451, 7
    %v453 = vsub.s32 3, %v452
    %v454 = vrot.slane %v437, %v453
    %v491 = vunpack.c.l.b16 %v404
    %v492 = vunpack.c.h.b16 %v404
    %v493 = vunpack.c.l.b16 %v405
    %v494 = vunpack.c.h.b16 %v405
    %v495 = vunpack.c.l.b16 %v406
    %v496 = vunpack.c.h.b16 %v406
    %v497 = vunpack.c.l.b16 %v407
    %v498 = vunpack.c.h.b16 %v407
    %v499 = vunpack.c.l.b16 %v408
    %v500 = vunpack.c.h.b16 %v408
    %v501 = vunpack.c.l.b16 %v409
    %v502 = vunpack.c.h.b16 %v409
    %v503 = vunpack.c.l.b16 %v410
    %v504 = vunpack.c.h.b16 %v410
    %v505 = vunpack.c.l.b16 %v411
    %v506 = vunpack.c.h.b16 %v411
    %v507 = vunpack.c.l.b16 %v412
    %v508 = vunpack.c.h.b16 %v412
    %v509 = vunpack.c.l.b16 %v413
    %v510 = vunpack.c.h.b16 %v413
    %v511 = vunpack.c.l.b16 %v414
    %v512 = vunpack.c.h.b16 %v414
    %v513 = vunpack.c.l.b16 %v415
    %v514 = vunpack.c.h.b16 %v415
    %v515 = vunpack.c.l.b16 %v416
    %v516 = vunpack.c.h.b16 %v416
    %v517 = vunpack.c.l.b16 %v417
    %v518 = vunpack.c.h.b16 %v417
    %v519 = vunpack.c.l.b16 %v418
    %v520 = vunpack.c.h.b16 %v418
    %v521 = vunpack.c.l.b16 %v419
    %v522 = vunpack.c.h.b16 %v419
    %v523 = vunpack.c.l.b16 %v420
    %v524 = vunpack.c.h.b16 %v420
    %v525 = vunpack.c.l.b16 %v421
    %v526 = vunpack.c.h.b16 %v421
    %v527 = vunpack.c.l.b16 %v422
    %v528 = vunpack.c.h.b16 %v422
    %v529 = vunpack.c.l.b16 %v423
    %v530 = vunpack.c.h.b16 %v423
    %v531 = vunpack.c.l.b16 %v424
    %v532 = vunpack.c.h.b16 %v424
    %v533 = vunpack.c.l.b16 %v425
    %v534 = vunpack.c.h.b16 %v425
    %v535 = vunpack.c.l.b16 %v426
    %v536 = vunpack.c.h.b16 %v426
    %v537 = vunpack.c.l.b16 %v427
    %v538 = vunpack.c.h.b16 %v427
    %v539 = vunpack.c.l.b16 %v428
    %v540 = vunpack.c.h.b16 %v428
    %v541 = vunpack.c.l.b16 %v429
    %v542 = vunpack.c.h.b16 %v429
    %v543 = vunpack.c.l.b16 %v430
    %v544 = vunpack.c.h.b16 %v430
    %v545 = vunpack.c.l.b16 %v431
    %v546 = vunpack.c.h.b16 %v431
    %v547 = vunpack.c.l.b16 %v432
    %v548 = vunpack.c.h.b16 %v432
    %v549 = vunpack.c.l.b16 %v433
    %v550 = vunpack.c.h.b16 %v433
    %v551 = vunpack.c.l.b16 %v434
    %v552 = vunpack.c.h.b16 %v434
    %v553 = vunpack.c.l.b16 %v435
    %v554 = vunpack.c.h.b16 %v435
    %v555 = vpack.c.b16 %v495, %v491
    %v556 = vpack.c.b16 %v496, %v492
    %v557 = vpack.c.b16 %v497, %v493
    %v558 = vpack.c.b16 %v498, %v494
    %v559 = vpack.c.b16 %v503, %v499
    %v560 = vpack.c.b16 %v504, %v500
    %v561 = vpack.c.b16 %v505, %v501
    %v562 = vpack.c.b16 %v506, %v502
    %v563 = vpack.c.b16 %v511, %v507
    %v564 = vpack.c.b16 %v512, %v508
    %v565 = vpack.c.b16 %v513, %v509
    %v566 = vpack.c.b16 %v514, %v510
    %v567 = vpack.c.b16 %v519, %v515
    %v568 = vpack.c.b16 %v520, %v516
    %v569 = vpack.c.b16 %v521, %v517
    %v570 = vpack.c.b16 %v522, %v518
    %v571 = vpack.c.b16 %v527, %v523
    %v572 = vpack.c.b16 %v528, %v524
    %v573 = vpack.c.b16 %v529, %v525
    %v574 = vpack.c.b16 %v530, %v526
    %v575 = vpack.c.b16 %v535, %v531
    %v576 = vpack.c.b16 %v536, %v532
    %v577 = vpack.c.b16 %v537, %v533
    %v578 = vpack.c.b16 %v538, %v534
    %v579 = vpack.c.b16 %v543, %v539
    %v580 = vpack.c.b16 %v544, %v540
    %v581 = vpack.c.b16 %v545, %v541
    %v582 = vpack.c.b16 %v546, %v542
    %v583 = vpack.c.b16 %v551, %v547
    %v584 = vpack.c.b16 %v552, %v548
    %v585 = vpack.c.b16 %v553, %v549
    %v586 = vpack.c.b16 %v554, %v550
    %619 = vmatprep.subr.bf16.mxu0 %v556
    %620 = vmatpush1.bf16.msra.mxu0 %v555
    %621 = vmatprep.subr.bf16.mxu0 %v560
    %622 = vmatpush1.bf16.msra.mxu0 %v559
    %623 = vmatprep.subr.bf16.mxu0 %v564
    %624 = vmatpush1.bf16.msra.mxu0 %v563
    %625 = vmatprep.subr.bf16.mxu0 %v568
    %626 = vmatpush1.bf16.msra.mxu0 %v567
    %627 = vmatprep.subr.bf16.mxu0 %v572
    %628 = vmatpush1.bf16.msra.mxu0 %v571
    %629 = vmatprep.subr.bf16.mxu0 %v576
    %630 = vmatpush1.bf16.msra.mxu0 %v575
    %631 = vmatprep.subr.bf16.mxu0 %v580
    %632 = vmatpush1.bf16.msra.mxu0 %v579
    %633 = vmatprep.subr.bf16.mxu0 %v584
    %634 = vmatpush1.bf16.msra.mxu0 %v583
    %635 = vmatprep.subr.bf16.mxu0 0
    %636 = vmatpush1.bf16.msra.mxu0 0
    %637 = vmatprep.subr.bf16.mxu0 0
    %638 = vmatpush1.bf16.msra.mxu0 0
    %639 = vmatprep.subr.bf16.mxu0 0
    %640 = vmatpush1.bf16.msra.mxu0 0
    %641 = vmatprep.subr.bf16.mxu0 0
    %642 = vmatpush1.bf16.msra.mxu0 0
    %643 = vmatprep.subr.bf16.mxu0 0
    %644 = vmatpush1.bf16.msra.mxu0 0
    %645 = vmatprep.subr.bf16.mxu0 0
    %646 = vmatpush1.bf16.msra.mxu0 0
    %647 = vmatprep.subr.bf16.mxu0 0
    %648 = vmatpush1.bf16.msra.mxu0 0
    %649 = vmatprep.subr.bf16.mxu0 0
    %650 = vmatpush1.bf16.msra.mxu0 0
    %651 = vmatprep.mubr.bf16.mxu0 0
    %652 = vmatmul.mubr.bf16.gmra.mrb[0].mxu0 %v402
    %v653 = vpop.f32.mrb[0].mxu0
    %v654 = vadd.f32 %v442, %v653
    %v655 = vpop.f32.mrb[0].mxu0
    %v656 = vadd.f32 %v446, %v655
    %v657 = vpop.f32.mrb[0].mxu0
    %v658 = vpop.f32.mrb[0].mxu0
    %659 = vdwg.mxu0
    %660 = vmatprep.subr.bf16.mxu0 %v558
    %661 = vmatpush1.bf16.msra.mxu0 %v557
    %662 = vmatprep.subr.bf16.mxu0 %v562
    %663 = vmatpush1.bf16.msra.mxu0 %v561
    %664 = vmatprep.subr.bf16.mxu0 %v566
    %665 = vmatpush1.bf16.msra.mxu0 %v565
    %666 = vmatprep.subr.bf16.mxu0 %v570
    %667 = vmatpush1.bf16.msra.mxu0 %v569
    %668 = vmatprep.subr.bf16.mxu0 %v574
    %669 = vmatpush1.bf16.msra.mxu0 %v573
    %670 = vmatprep.subr.bf16.mxu0 %v578
    %671 = vmatpush1.bf16.msra.mxu0 %v577
    %672 = vmatprep.subr.bf16.mxu0 %v582
    %673 = vmatpush1.bf16.msra.mxu0 %v581
    %674 = vmatprep.subr.bf16.mxu0 %v586
    %675 = vmatpush1.bf16.msra.mxu0 %v585
    %676 = vmatprep.subr.bf16.mxu0 0
    %677 = vmatpush1.bf16.msra.mxu0 0
    %678 = vmatprep.subr.bf16.mxu0 0
    %679 = vmatpush1.bf16.msra.mxu0 0
    %680 = vmatprep.subr.bf16.mxu0 0
    %681 = vmatpush1.bf16.msra.mxu0 0
    %682 = vmatprep.subr.bf16.mxu0 0
    %683 = vmatpush1.bf16.msra.mxu0 0
    %684 = vmatprep.subr.bf16.mxu0 0
    %685 = vmatpush1.bf16.msra.mxu0 0
    %686 = vmatprep.subr.bf16.mxu0 0
    %687 = vmatpush1.bf16.msra.mxu0 0
    %688 = vmatprep.subr.bf16.mxu0 0
    %689 = vmatpush1.bf16.msra.mxu0 0
    %690 = vmatprep.subr.bf16.mxu0 0
    %691 = vmatpush1.bf16.msra.mxu0 0
    %692 = vmatprep.mubr.bf16.mxu0 0
    %693 = vmatmul.mubr.bf16.gmra.mrb[0].mxu0 %v402
    %v694 = vpop.f32.mrb[0].mxu0
    %v695 = vadd.f32 %v450, %v694
    %v696 = vpop.f32.mrb[0].mxu0
    %v697 = vadd.f32 %v454, %v696
    %v698 = vpop.f32.mrb[0].mxu0
    %v699 = vpop.f32.mrb[0].mxu0
    %700 = vdwg.mxu0
    %v701 = vld [vmem:[#allocation3] sm:$0xff]
    %v702 = vpack.c.bf16 %v701, %v701
    %v703 = vld [vmem:[#allocation9] sm:$0xff]
    %v704 = vld [vmem:[#allocation9 + $0x8] sm:$0xff]
    %v705 = vld [vmem:[#allocation9 + $0x10] sm:$0xff]
    %v706 = vld [vmem:[#allocation9 + $0x18] sm:$0xff]
    %v707 = vld [vmem:[#allocation9 + $0x20] sm:$0xff]
    %v708 = vld [vmem:[#allocation9 + $0x28] sm:$0xff]
    %v709 = vld [vmem:[#allocation9 + $0x30] sm:$0xff]
    %v710 = vld [vmem:[#allocation9 + $0x38] sm:$0xff]
    %v711 = vld [vmem:[#allocation9 + $0x40] sm:$0xff]
    %v712 = vld [vmem:[#allocation9 + $0x48] sm:$0xff]
    %v713 = vld [vmem:[#allocation9 + $0x50] sm:$0xff]
    %v714 = vld [vmem:[#allocation9 + $0x58] sm:$0xff]
    %v715 = vld [vmem:[#allocation9 + $0x60] sm:$0xff]
    %v716 = vld [vmem:[#allocation9 + $0x68] sm:$0xff]
    %v717 = vld [vmem:[#allocation9 + $0x70] sm:$0xff]
    %v718 = vld [vmem:[#allocation9 + $0x78] sm:$0xff]
    %v719 = vld [vmem:[#allocation9 + $0x80] sm:$0xff]
    %v720 = vld [vmem:[#allocation9 + $0x88] sm:$0xff]
    %v721 = vld [vmem:[#allocation9 + $0x90] sm:$0xff]
    %v722 = vld [vmem:[#allocation9 + $0x98] sm:$0xff]
    %v723 = vld [vmem:[#allocation9 + $0xa0] sm:$0xff]
    %v724 = vld [vmem:[#allocation9 + $0xa8] sm:$0xff]
    %v725 = vld [vmem:[#allocation9 + $0xb0] sm:$0xff]
    %v726 = vld [vmem:[#allocation9 + $0xb8] sm:$0xff]
    %v727 = vld [vmem:[#allocation9 + $0xc0] sm:$0xff]
    %v728 = vld [vmem:[#allocation9 + $0xc8] sm:$0xff]
    %v729 = vld [vmem:[#allocation9 + $0xd0] sm:$0xff]
    %v730 = vld [vmem:[#allocation9 + $0xd8] sm:$0xff]
    %v731 = vld [vmem:[#allocation9 + $0xe0] sm:$0xff]
    %v732 = vld [vmem:[#allocation9 + $0xe8] sm:$0xff]
    %v733 = vld [vmem:[#allocation9 + $0xf0] sm:$0xff]
    %v734 = vld [vmem:[#allocation9 + $0xf8] sm:$0xff]
    %v767 = vunpack.c.l.b16 %v703
    %v768 = vunpack.c.h.b16 %v703
    %v769 = vunpack.c.l.b16 %v704
    %v770 = vunpack.c.h.b16 %v704
    %v771 = vunpack.c.l.b16 %v705
    %v772 = vunpack.c.h.b16 %v705
    %v773 = vunpack.c.l.b16 %v706
    %v774 = vunpack.c.h.b16 %v706
    %v775 = vunpack.c.l.b16 %v707
    %v776 = vunpack.c.h.b16 %v707
    %v777 = vunpack.c.l.b16 %v708
    %v778 = vunpack.c.h.b16 %v708
    %v779 = vunpack.c.l.b16 %v709
    %v780 = vunpack.c.h.b16 %v709
    %v781 = vunpack.c.l.b16 %v710
    %v782 = vunpack.c.h.b16 %v710
    %v783 = vunpack.c.l.b16 %v711
    %v784 = vunpack.c.h.b16 %v711
    %v785 = vunpack.c.l.b16 %v712
    %v786 = vunpack.c.h.b16 %v712
    %v787 = vunpack.c.l.b16 %v713
    %v788 = vunpack.c.h.b16 %v713
    %v789 = vunpack.c.l.b16 %v714
    %v790 = vunpack.c.h.b16 %v714
    %v791 = vunpack.c.l.b16 %v715
    %v792 = vunpack.c.h.b16 %v715
    %v793 = vunpack.c.l.b16 %v716
    %v794 = vunpack.c.h.b16 %v716
    %v795 = vunpack.c.l.b16 %v717
    %v796 = vunpack.c.h.b16 %v717
    %v797 = vunpack.c.l.b16 %v718
    %v798 = vunpack.c.h.b16 %v718
    %v799 = vunpack.c.l.b16 %v719
    %v800 = vunpack.c.h.b16 %v719
    %v801 = vunpack.c.l.b16 %v720
    %v802 = vunpack.c.h.b16 %v720
    %v803 = vunpack.c.l.b16 %v721
    %v804 = vunpack.c.h.b16 %v721
    %v805 = vunpack.c.l.b16 %v722
    %v806 = vunpack.c.h.b16 %v722
    %v807 = vunpack.c.l.b16 %v723
    %v808 = vunpack.c.h.b16 %v723
    %v809 = vunpack.c.l.b16 %v724
    %v810 = vunpack.c.h.b16 %v724
    %v811 = vunpack.c.l.b16 %v725
    %v812 = vunpack.c.h.b16 %v725
    %v813 = vunpack.c.l.b16 %v726
    %v814 = vunpack.c.h.b16 %v726
    %v815 = vunpack.c.l.b16 %v727
    %v816 = vunpack.c.h.b16 %v727
    %v817 = vunpack.c.l.b16 %v728
    %v818 = vunpack.c.h.b16 %v728
    %v819 = vunpack.c.l.b16 %v729
    %v820 = vunpack.c.h.b16 %v729
    %v821 = vunpack.c.l.b16 %v730
    %v822 = vunpack.c.h.b16 %v730
    %v823 = vunpack.c.l.b16 %v731
    %v824 = vunpack.c.h.b16 %v731
    %v825 = vunpack.c.l.b16 %v732
    %v826 = vunpack.c.h.b16 %v732
    %v827 = vunpack.c.l.b16 %v733
    %v828 = vunpack.c.h.b16 %v733
    %v829 = vunpack.c.l.b16 %v734
    %v830 = vunpack.c.h.b16 %v734
    %v831 = vpack.c.b16 %v771, %v767
    %v832 = vpack.c.b16 %v772, %v768
    %v833 = vpack.c.b16 %v773, %v769
    %v834 = vpack.c.b16 %v774, %v770
    %v835 = vpack.c.b16 %v779, %v775
    %v836 = vpack.c.b16 %v780, %v776
    %v837 = vpack.c.b16 %v781, %v777
    %v838 = vpack.c.b16 %v782, %v778
    %v839 = vpack.c.b16 %v787, %v783
    %v840 = vpack.c.b16 %v788, %v784
    %v841 = vpack.c.b16 %v789, %v785
    %v842 = vpack.c.b16 %v790, %v786
    %v843 = vpack.c.b16 %v795, %v791
    %v844 = vpack.c.b16 %v796, %v792
    %v845 = vpack.c.b16 %v797, %v793
    %v846 = vpack.c.b16 %v798, %v794
    %v847 = vpack.c.b16 %v803, %v799
    %v848 = vpack.c.b16 %v804, %v800
    %v849 = vpack.c.b16 %v805, %v801
    %v850 = vpack.c.b16 %v806, %v802
    %v851 = vpack.c.b16 %v811, %v807
    %v852 = vpack.c.b16 %v812, %v808
    %v853 = vpack.c.b16 %v813, %v809
    %v854 = vpack.c.b16 %v814, %v810
    %v855 = vpack.c.b16 %v819, %v815
    %v856 = vpack.c.b16 %v820, %v816
    %v857 = vpack.c.b16 %v821, %v817
    %v858 = vpack.c.b16 %v822, %v818
    %v859 = vpack.c.b16 %v827, %v823
    %v860 = vpack.c.b16 %v828, %v824
    %v861 = vpack.c.b16 %v829, %v825
    %v862 = vpack.c.b16 %v830, %v826
    %895 = vmatprep.subr.bf16.mxu0 %v832
    %896 = vmatpush1.bf16.msra.mxu0 %v831
    %897 = vmatprep.subr.bf16.mxu0 %v836
    %898 = vmatpush1.bf16.msra.mxu0 %v835
    %899 = vmatprep.subr.bf16.mxu0 %v840
    %900 = vmatpush1.bf16.msra.mxu0 %v839
    %901 = vmatprep.subr.bf16.mxu0 %v844
    %902 = vmatpush1.bf16.msra.mxu0 %v843
    %903 = vmatprep.subr.bf16.mxu0 %v848
    %904 = vmatpush1.bf16.msra.mxu0 %v847
    %905 = vmatprep.subr.bf16.mxu0 %v852
    %906 = vmatpush1.bf16.msra.mxu0 %v851
    %907 = vmatprep.subr.bf16.mxu0 %v856
    %908 = vmatpush1.bf16.msra.mxu0 %v855
    %909 = vmatprep.subr.bf16.mxu0 %v860
    %910 = vmatpush1.bf16.msra.mxu0 %v859
    %911 = vmatprep.subr.bf16.mxu0 0
    %912 = vmatpush1.bf16.msra.mxu0 0
    %913 = vmatprep.subr.bf16.mxu0 0
    %914 = vmatpush1.bf16.msra.mxu0 0
    %915 = vmatprep.subr.bf16.mxu0 0
    %916 = vmatpush1.bf16.msra.mxu0 0
    %917 = vmatprep.subr.bf16.mxu0 0
    %918 = vmatpush1.bf16.msra.mxu0 0
    %919 = vmatprep.subr.bf16.mxu0 0
    %920 = vmatpush1.bf16.msra.mxu0 0
    %921 = vmatprep.subr.bf16.mxu0 0
    %922 = vmatpush1.bf16.msra.mxu0 0
    %923 = vmatprep.subr.bf16.mxu0 0
    %924 = vmatpush1.bf16.msra.mxu0 0
    %925 = vmatprep.subr.bf16.mxu0 0
    %926 = vmatpush1.bf16.msra.mxu0 0
    %927 = vmatprep.mubr.bf16.mxu0 0
    %928 = vmatmul.mubr.bf16.gmra.mrb[0].mxu0 %v702
    %v929 = vpop.f32.mrb[0].mxu0
    %v930 = vadd.f32 %v353, %v929
    %v931 = vpop.f32.mrb[0].mxu0
    %v932 = vadd.f32 %v355, %v931
    %v933 = vpop.f32.mrb[0].mxu0
    %v934 = vpop.f32.mrb[0].mxu0
    %935 = vdwg.mxu0
    %936 = vmatprep.subr.bf16.mxu0 %v834
    %937 = vmatpush1.bf16.msra.mxu0 %v833
    %938 = vmatprep.subr.bf16.mxu0 %v838
    %939 = vmatpush1.bf16.msra.mxu0 %v837
    %940 = vmatprep.subr.bf16.mxu0 %v842
    %941 = vmatpush1.bf16.msra.mxu0 %v841
    %942 = vmatprep.subr.bf16.mxu0 %v846
    %943 = vmatpush1.bf16.msra.mxu0 %v845
    %944 = vmatprep.subr.bf16.mxu0 %v850
    %945 = vmatpush1.bf16.msra.mxu0 %v849
    %946 = vmatprep.subr.bf16.mxu0 %v854
    %947 = vmatpush1.bf16.msra.mxu0 %v853
    %948 = vmatprep.subr.bf16.mxu0 %v858
    %949 = vmatpush1.bf16.msra.mxu0 %v857
    %950 = vmatprep.subr.bf16.mxu0 %v862
    %951 = vmatpush1.bf16.msra.mxu0 %v861
    %952 = vmatprep.subr.bf16.mxu0 0
    %953 = vmatpush1.bf16.msra.mxu0 0
    %954 = vmatprep.subr.bf16.mxu0 0
    %955 = vmatpush1.bf16.msra.mxu0 0
    %956 = vmatprep.subr.bf16.mxu0 0
    %957 = vmatpush1.bf16.msra.mxu0 0
    %958 = vmatprep.subr.bf16.mxu0 0
    %959 = vmatpush1.bf16.msra.mxu0 0
    %960 = vmatprep.subr.bf16.mxu0 0
    %961 = vmatpush1.bf16.msra.mxu0 0
    %962 = vmatprep.subr.bf16.mxu0 0
    %963 = vmatpush1.bf16.msra.mxu0 0
    %964 = vmatprep.subr.bf16.mxu0 0
    %965 = vmatpush1.bf16.msra.mxu0 0
    %966 = vmatprep.subr.bf16.mxu0 0
    %967 = vmatpush1.bf16.msra.mxu0 0
    %968 = vmatprep.mubr.bf16.mxu0 0
    %969 = vmatmul.mubr.bf16.gmra.mrb[0].mxu0 %v702
    %v970 = vpop.f32.mrb[0].mxu0
    %v971 = vadd.f32 %v394, %v970
    %v972 = vpop.f32.mrb[0].mxu0
    %v973 = vadd.f32 %v396, %v972
    %v974 = vpop.f32.mrb[0].mxu0
    %v975 = vpop.f32.mrb[0].mxu0
    %976 = vdwg.mxu0
    %v977 = vxor.u32 %v930, 2147483648
    %v978 = vmul.f32 %v977, 1.442695
    %v979 = vpow.pop %v978
    %v980 = vadd.f32 %v979, 1.0
    %v981 = vrcp.pop %v980
    %v982 = vmul.f32 1.0, %v981
    %v983 = vxor.u32 %v932, 2147483648
    %v984 = vmul.f32 %v983, 1.442695
    %v985 = vpow.pop %v984
    %v986 = vadd.f32 %v985, 1.0
    %v987 = vrcp.pop %v986
    %v988 = vmul.f32 1.0, %v987
    %v989 = vtanh.pop %v971
    %v990 = vxor.u32 %v973, 2147483648
    %v991 = vmul.f32 %v990, 1.442695
    %v992 = vpow.pop %v991
    %v993 = vadd.f32 %v992, 1.0
    %v994 = vrcp.pop %v993
    %v995 = vmul.f32 1.0, %v994
    %v996 = vld [vmem:[#allocation8] sm:$0xff]
    %v997 = vmul.f32 %v988, %v996
    %v998 = vmul.f32 %v982, %v989
    %v999 = vadd.f32 %v997, %v998
    %v1000 = vtanh.pop %v999
    %v1001 = vmul.f32 %v995, %v1000
    %1002 = vst [vmem:[#allocation12] sm:$0xff] %v1001
    %1003 = vst [vmem:[#allocation13] sm:$0xff] %v999
    %v1004 = vpack.c.bf16 %v1001, %v1001
    %s1005 = scalar_lea.vmem [#allocation9], 256
    %v1006 = vld [vmem:[%s1005] sm:$0xff]
    %v1007 = vld [vmem:[%s1005 + $0x8] sm:$0xff]
    %v1008 = vld [vmem:[%s1005 + $0x10] sm:$0xff]
    %v1009 = vld [vmem:[%s1005 + $0x18] sm:$0xff]
    %v1010 = vld [vmem:[%s1005 + $0x20] sm:$0xff]
    %v1011 = vld [vmem:[%s1005 + $0x28] sm:$0xff]
    %v1012 = vld [vmem:[%s1005 + $0x30] sm:$0xff]
    %v1013 = vld [vmem:[%s1005 + $0x38] sm:$0xff]
    %v1014 = vld [vmem:[%s1005 + $0x40] sm:$0xff]
    %v1015 = vld [vmem:[%s1005 + $0x48] sm:$0xff]
    %v1016 = vld [vmem:[%s1005 + $0x50] sm:$0xff]
    %v1017 = vld [vmem:[%s1005 + $0x58] sm:$0xff]
    %v1018 = vld [vmem:[%s1005 + $0x60] sm:$0xff]
    %v1019 = vld [vmem:[%s1005 + $0x68] sm:$0xff]
    %v1020 = vld [vmem:[%s1005 + $0x70] sm:$0xff]
    %v1021 = vld [vmem:[%s1005 + $0x78] sm:$0xff]
    %v1022 = vld [vmem:[%s1005 + $0x80] sm:$0xff]
    %v1023 = vld [vmem:[%s1005 + $0x88] sm:$0xff]
    %v1024 = vld [vmem:[%s1005 + $0x90] sm:$0xff]
    %v1025 = vld [vmem:[%s1005 + $0x98] sm:$0xff]
    %v1026 = vld [vmem:[%s1005 + $0xa0] sm:$0xff]
    %v1027 = vld [vmem:[%s1005 + $0xa8] sm:$0xff]
    %v1028 = vld [vmem:[%s1005 + $0xb0] sm:$0xff]
    %v1029 = vld [vmem:[%s1005 + $0xb8] sm:$0xff]
    %v1030 = vld [vmem:[%s1005 + $0xc0] sm:$0xff]
    %v1031 = vld [vmem:[%s1005 + $0xc8] sm:$0xff]
    %v1032 = vld [vmem:[%s1005 + $0xd0] sm:$0xff]
    %v1033 = vld [vmem:[%s1005 + $0xd8] sm:$0xff]
    %v1034 = vld [vmem:[%s1005 + $0xe0] sm:$0xff]
    %v1035 = vld [vmem:[%s1005 + $0xe8] sm:$0xff]
    %v1036 = vld [vmem:[%s1005 + $0xf0] sm:$0xff]
    %v1037 = vld [vmem:[%s1005 + $0xf8] sm:$0xff]
    %v1070 = vunpack.c.l.b16 %v1006
    %v1071 = vunpack.c.h.b16 %v1006
    %v1072 = vunpack.c.l.b16 %v1007
    %v1073 = vunpack.c.h.b16 %v1007
    %v1074 = vunpack.c.l.b16 %v1008
    %v1075 = vunpack.c.h.b16 %v1008
    %v1076 = vunpack.c.l.b16 %v1009
    %v1077 = vunpack.c.h.b16 %v1009
    %v1078 = vunpack.c.l.b16 %v1010
    %v1079 = vunpack.c.h.b16 %v1010
    %v1080 = vunpack.c.l.b16 %v1011
    %v1081 = vunpack.c.h.b16 %v1011
    %v1082 = vunpack.c.l.b16 %v1012
    %v1083 = vunpack.c.h.b16 %v1012
    %v1084 = vunpack.c.l.b16 %v1013
    %v1085 = vunpack.c.h.b16 %v1013
    %v1086 = vunpack.c.l.b16 %v1014
    %v1087 = vunpack.c.h.b16 %v1014
    %v1088 = vunpack.c.l.b16 %v1015
    %v1089 = vunpack.c.h.b16 %v1015
    %v1090 = vunpack.c.l.b16 %v1016
    %v1091 = vunpack.c.h.b16 %v1016
    %v1092 = vunpack.c.l.b16 %v1017
    %v1093 = vunpack.c.h.b16 %v1017
    %v1094 = vunpack.c.l.b16 %v1018
    %v1095 = vunpack.c.h.b16 %v1018
    %v1096 = vunpack.c.l.b16 %v1019
    %v1097 = vunpack.c.h.b16 %v1019
    %v1098 = vunpack.c.l.b16 %v1020
    %v1099 = vunpack.c.h.b16 %v1020
    %v1100 = vunpack.c.l.b16 %v1021
    %v1101 = vunpack.c.h.b16 %v1021
    %v1102 = vunpack.c.l.b16 %v1022
    %v1103 = vunpack.c.h.b16 %v1022
    %v1104 = vunpack.c.l.b16 %v1023
    %v1105 = vunpack.c.h.b16 %v1023
    %v1106 = vunpack.c.l.b16 %v1024
    %v1107 = vunpack.c.h.b16 %v1024
    %v1108 = vunpack.c.l.b16 %v1025
    %v1109 = vunpack.c.h.b16 %v1025
    %v1110 = vunpack.c.l.b16 %v1026
    %v1111 = vunpack.c.h.b16 %v1026
    %v1112 = vunpack.c.l.b16 %v1027
    %v1113 = vunpack.c.h.b16 %v1027
    %v1114 = vunpack.c.l.b16 %v1028
    %v1115 = vunpack.c.h.b16 %v1028
    %v1116 = vunpack.c.l.b16 %v1029
    %v1117 = vunpack.c.h.b16 %v1029
    %v1118 = vunpack.c.l.b16 %v1030
    %v1119 = vunpack.c.h.b16 %v1030
    %v1120 = vunpack.c.l.b16 %v1031
    %v1121 = vunpack.c.h.b16 %v1031
    %v1122 = vunpack.c.l.b16 %v1032
    %v1123 = vunpack.c.h.b16 %v1032
    %v1124 = vunpack.c.l.b16 %v1033
    %v1125 = vunpack.c.h.b16 %v1033
    %v1126 = vunpack.c.l.b16 %v1034
    %v1127 = vunpack.c.h.b16 %v1034
    %v1128 = vunpack.c.l.b16 %v1035
    %v1129 = vunpack.c.h.b16 %v1035
    %v1130 = vunpack.c.l.b16 %v1036
    %v1131 = vunpack.c.h.b16 %v1036
    %v1132 = vunpack.c.l.b16 %v1037
    %v1133 = vunpack.c.h.b16 %v1037
    %v1134 = vpack.c.b16 %v1074, %v1070
    %v1135 = vpack.c.b16 %v1075, %v1071
    %v1136 = vpack.c.b16 %v1076, %v1072
    %v1137 = vpack.c.b16 %v1077, %v1073
    %v1138 = vpack.c.b16 %v1082, %v1078
    %v1139 = vpack.c.b16 %v1083, %v1079
    %v1140 = vpack.c.b16 %v1084, %v1080
    %v1141 = vpack.c.b16 %v1085, %v1081
    %v1142 = vpack.c.b16 %v1090, %v1086
    %v1143 = vpack.c.b16 %v1091, %v1087
    %v1144 = vpack.c.b16 %v1092, %v1088
    %v1145 = vpack.c.b16 %v1093, %v1089
    %v1146 = vpack.c.b16 %v1098, %v1094
    %v1147 = vpack.c.b16 %v1099, %v1095
    %v1148 = vpack.c.b16 %v1100, %v1096
    %v1149 = vpack.c.b16 %v1101, %v1097
    %v1150 = vpack.c.b16 %v1106, %v1102
    %v1151 = vpack.c.b16 %v1107, %v1103
    %v1152 = vpack.c.b16 %v1108, %v1104
    %v1153 = vpack.c.b16 %v1109, %v1105
    %v1154 = vpack.c.b16 %v1114, %v1110
    %v1155 = vpack.c.b16 %v1115, %v1111
    %v1156 = vpack.c.b16 %v1116, %v1112
    %v1157 = vpack.c.b16 %v1117, %v1113
    %v1158 = vpack.c.b16 %v1122, %v1118
    %v1159 = vpack.c.b16 %v1123, %v1119
    %v1160 = vpack.c.b16 %v1124, %v1120
    %v1161 = vpack.c.b16 %v1125, %v1121
    %v1162 = vpack.c.b16 %v1130, %v1126
    %v1163 = vpack.c.b16 %v1131, %v1127
    %v1164 = vpack.c.b16 %v1132, %v1128
    %v1165 = vpack.c.b16 %v1133, %v1129
    %1198 = vmatprep.subr.bf16.mxu0 %v1135
    %1199 = vmatpush1.bf16.msra.mxu0 %v1134
    %1200 = vmatprep.subr.bf16.mxu0 %v1139
    %1201 = vmatpush1.bf16.msra.mxu0 %v1138
    %1202 = vmatprep.subr.bf16.mxu0 %v1143
    %1203 = vmatpush1.bf16.msra.mxu0 %v1142
    %1204 = vmatprep.subr.bf16.mxu0 %v1147
    %1205 = vmatpush1.bf16.msra.mxu0 %v1146
    %1206 = vmatprep.subr.bf16.mxu0 %v1151
    %1207 = vmatpush1.bf16.msra.mxu0 %v1150
    %1208 = vmatprep.subr.bf16.mxu0 %v1155
    %1209 = vmatpush1.bf16.msra.mxu0 %v1154
    %1210 = vmatprep.subr.bf16.mxu0 %v1159
    %1211 = vmatpush1.bf16.msra.mxu0 %v1158
    %1212 = vmatprep.subr.bf16.mxu0 %v1163
    %1213 = vmatpush1.bf16.msra.mxu0 %v1162
    %1214 = vmatprep.subr.bf16.mxu0 0
    %1215 = vmatpush1.bf16.msra.mxu0 0
    %1216 = vmatprep.subr.bf16.mxu0 0
    %1217 = vmatpush1.bf16.msra.mxu0 0
    %1218 = vmatprep.subr.bf16.mxu0 0
    %1219 = vmatpush1.bf16.msra.mxu0 0
    %1220 = vmatprep.subr.bf16.mxu0 0
    %1221 = vmatpush1.bf16.msra.mxu0 0
    %1222 = vmatprep.subr.bf16.mxu0 0
    %1223 = vmatpush1.bf16.msra.mxu0 0
    %1224 = vmatprep.subr.bf16.mxu0 0
    %1225 = vmatpush1.bf16.msra.mxu0 0
    %1226 = vmatprep.subr.bf16.mxu0 0
    %1227 = vmatpush1.bf16.msra.mxu0 0
    %1228 = vmatprep.subr.bf16.mxu0 0
    %1229 = vmatpush1.bf16.msra.mxu0 0
    %1230 = vmatprep.mubr.bf16.mxu0 0
    %1231 = vmatmul.mubr.bf16.gmra.mrb[0].mxu0 %v1004
    %v1232 = vpop.f32.mrb[0].mxu0
    %v1233 = vadd.f32 %v654, %v1232
    %v1234 = vpop.f32.mrb[0].mxu0
    %v1235 = vadd.f32 %v656, %v1234
    %v1236 = vpop.f32.mrb[0].mxu0
    %v1237 = vpop.f32.mrb[0].mxu0
    %1238 = vdwg.mxu0
    %1239 = vmatprep.subr.bf16.mxu0 %v1137
    %1240 = vmatpush1.bf16.msra.mxu0 %v1136
    %1241 = vmatprep.subr.bf16.mxu0 %v1141
    %1242 = vmatpush1.bf16.msra.mxu0 %v1140
    %1243 = vmatprep.subr.bf16.mxu0 %v1145
    %1244 = vmatpush1.bf16.msra.mxu0 %v1144
    %1245 = vmatprep.subr.bf16.mxu0 %v1149
    %1246 = vmatpush1.bf16.msra.mxu0 %v1148
    %1247 = vmatprep.subr.bf16.mxu0 %v1153
    %1248 = vmatpush1.bf16.msra.mxu0 %v1152
    %1249 = vmatprep.subr.bf16.mxu0 %v1157
    %1250 = vmatpush1.bf16.msra.mxu0 %v1156
    %1251 = vmatprep.subr.bf16.mxu0 %v1161
    %1252 = vmatpush1.bf16.msra.mxu0 %v1160
    %1253 = vmatprep.subr.bf16.mxu0 %v1165
    %1254 = vmatpush1.bf16.msra.mxu0 %v1164
    %1255 = vmatprep.subr.bf16.mxu0 0
    %1256 = vmatpush1.bf16.msra.mxu0 0
    %1257 = vmatprep.subr.bf16.mxu0 0
    %1258 = vmatpush1.bf16.msra.mxu0 0
    %1259 = vmatprep.subr.bf16.mxu0 0
    %1260 = vmatpush1.bf16.msra.mxu0 0
    %1261 = vmatprep.subr.bf16.mxu0 0
    %1262 = vmatpush1.bf16.msra.mxu0 0
    %1263 = vmatprep.subr.bf16.mxu0 0
    %1264 = vmatpush1.bf16.msra.mxu0 0
    %1265 = vmatprep.subr.bf16.mxu0 0
    %1266 = vmatpush1.bf16.msra.mxu0 0
    %1267 = vmatprep.subr.bf16.mxu0 0
    %1268 = vmatpush1.bf16.msra.mxu0 0
    %1269 = vmatprep.subr.bf16.mxu0 0
    %1270 = vmatpush1.bf16.msra.mxu0 0
    %1271 = vmatprep.mubr.bf16.mxu0 0
    %1272 = vmatmul.mubr.bf16.gmra.mrb[0].mxu0 %v1004
    %v1273 = vpop.f32.mrb[0].mxu0
    %v1274 = vadd.f32 %v695, %v1273
    %v1275 = vpop.f32.mrb[0].mxu0
    %v1276 = vadd.f32 %v697, %v1275
    %v1277 = vpop.f32.mrb[0].mxu0
    %v1278 = vpop.f32.mrb[0].mxu0
    %1279 = vdwg.mxu0
    %v1280 = vxor.u32 %v1233, 2147483648
    %v1281 = vmul.f32 %v1280, 1.442695
    %v1282 = vpow.pop %v1281
    %v1283 = vadd.f32 %v1282, 1.0
    %v1284 = vrcp.pop %v1283
    %v1285 = vmul.f32 1.0, %v1284
    %v1286 = vxor.u32 %v1235, 2147483648
    %v1287 = vmul.f32 %v1286, 1.442695
    %v1288 = vpow.pop %v1287
    %v1289 = vadd.f32 %v1288, 1.0
    %v1290 = vrcp.pop %v1289
    %v1291 = vmul.f32 1.0, %v1290
    %v1292 = vtanh.pop %v1274
    %v1293 = vxor.u32 %v1276, 2147483648
    %v1294 = vmul.f32 %v1293, 1.442695
    %v1295 = vpow.pop %v1294
    %v1296 = vadd.f32 %v1295, 1.0
    %v1297 = vrcp.pop %v1296
    %v1298 = vmul.f32 1.0, %v1297
    %s1299 = scalar_lea.vmem [#allocation8], 8
    %v1300 = vld [vmem:[%s1299] sm:$0xff]
    %v1301 = vmul.f32 %v1291, %v1300
    %v1302 = vmul.f32 %v1285, %v1292
    %v1303 = vadd.f32 %v1301, %v1302
    %v1304 = vtanh.pop %v1303
    %v1305 = vmul.f32 %v1298, %v1304
    %s1306 = scalar_lea.vmem [#allocation12], 8
    %1307 = vst [vmem:[%s1306] sm:$0xff] %v1305
    %s1308 = scalar_lea.vmem [#allocation13], 8
    %1309 = vst [vmem:[%s1308] sm:$0xff] %v1303
    %v1310 = vld [vmem:[%s6] sm:$0x1]
    %v1312 = vlaneseq
    %v1313 = vshrl.u32 %v1312, 7
    %v1314 = vsub.s32 0, %v1313
    %v1315 = vrot.slane %v1310, %v1314
    %v1317 = vmul.f32 %v1305, %v1315
    %1318 = vadd.xlane.f32.xlu0 %v1317
    %v1319 = vpop.xlane.xlu0 %1318
    %s1320 = sld [smem:[#allocation2]]
    %v1321 = vstv %s1320
    %v1322 = vadd.f32 %v1319, %v1321
    %1323 = vst [vmem:[%s10] sm:$0xff] %v1322
    // Predicated region
    $region54: #{cycle_decoder_forward.1} parent=1 // pred_check
      _
    $region55: #{cycle_decoder_forward.1} parent=1 // pred_check_branch
      %1325 = sbr.rel (0) target = $region57
    $region56: #{cycle_decoder_forward.1} parent=1 // pred_region
      %s1327 = ssub.s32 256, 256
      %1328 = vsyncadd [#allocation5], %s1327
      %s1329 = sshll.u32 [#allocation12], 4
      %s1330 = int_to_ptr.vmem [resolvable:$true] %s1329
      %1335 = dma.vmem_to_hbm [thread:$0]  %s1330, 256, %s8, [#allocation5], 128, 128, 8
    $region57: #{cycle_decoder_forward.1} parent=1 // pred_fallthru
      _
    // Predicated region
    $region58: #{cycle_decoder_forward.1} parent=1 // pred_check
      _
    $region59: #{cycle_decoder_forward.1} parent=1 // pred_check_branch
      %1337 = sbr.rel (0) target = $region61
    $region60: #{cycle_decoder_forward.1} parent=1 // pred_region
      %s1339 = ssub.s32 256, 256
      %1340 = vsyncadd [#allocation14], %s1339
      %s1341 = sshll.u32 [#allocation13], 4
      %s1342 = int_to_ptr.vmem [resolvable:$true] %s1341
      %1347 = dma.vmem_to_hbm [thread:$0]  %s1342, 256, %s9, [#allocation14], 128, 128, 8
    $region61: #{cycle_decoder_forward.1} parent=1 // pred_fallthru
      _
    // Predicated region
    $region62: #{cycle_decoder_forward.1} parent=1 // pred_check
      _
    $region63: #{cycle_decoder_forward.1} parent=1 // pred_check_branch
      %1349 = sbr.rel (0) target = $region65
    $region64: #{cycle_decoder_forward.1} parent=1 // pred_region
      _
    $region65: #{cycle_decoder_forward.1} parent=1 // pred_fallthru
      _
    // Predicated region
    $region66: #{cycle_decoder_forward.1} parent=1 // pred_check
      _
    $region67: #{cycle_decoder_forward.1} parent=1 // pred_check_branch
      %1351 = sbr.rel (0) target = $region69
    $region68: #{cycle_decoder_forward.1} parent=1 // pred_region
      %1352 = dma.done [#allocation5], 256
    $region69: #{cycle_decoder_forward.1} parent=1 // pred_fallthru
      _
    // Predicated region
    $region70: #{cycle_decoder_forward.1} parent=1 // pred_check
      _
    $region71: #{cycle_decoder_forward.1} parent=1 // pred_check_branch
      %1354 = sbr.rel (0) target = $region73
    $region72: #{cycle_decoder_forward.1} parent=1 // pred_region
      %1355 = dma.done [#allocation14], 256
    $region73: #{cycle_decoder_forward.1} parent=1 // pred_fallthru
      _
    // Predicated region
    $region74: #{cycle_decoder_forward.1} parent=1 // pred_check
      _
    $region75: #{cycle_decoder_forward.1} parent=1 // pred_check_branch
      %1357 = sbr.rel (0) target = $region77
    $region76: #{cycle_decoder_forward.1} parent=1 // pred_region
      _
    $region77: #{cycle_decoder_forward.1} parent=1 // pred_fallthru
      _
    %1358 = vsyncpa [#allocation4], 1
    %1359 = vsyncpa [#allocation7], 1
    %1360 = vsyncpa [#allocation10], 1
    %1361 = vsyncpa [#allocation5], 1
    %1362 = vsyncpa [#allocation14], 1

</llo_original>
